<compile_context>
chip_gen: v5e
topology: v5e:2x2
jax: 0.10.0
libtpu: 0.0.40
codegen_flags: <defaults>
</compile_context>

<pallas_src>
import math

import jax
import jax.numpy as jnp
from jax.experimental import pallas as pl
from jax.experimental.pallas import tpu as pltpu

BN_EPS = 1e-5
HIDDEN_DIMS = (256, 128, 64)


def _round_up(n, m):
    return ((n + m - 1) // m) * m


def _mlp_kernel(x_ref,
                w1_ref, b1_ref,
                w2_ref, b2_ref,
                w3_ref, b3_ref,
                w4_ref, b4_ref,
                o_ref):
    """One batch tile: 3x (Linear -> ReLU) + Linear(., 1) head.

    BN(eval) is pre-folded into the next layer's weights/bias; Dropout is
    identity in eval mode.  Matmuls take bf16 operands with f32 accumulation;
    bias add / ReLU stay in f32.  The head emits a lane-dense (1, tile_b) row.
    """
    # Cast the f32 input tile to bf16 on the VPU (hidden under the MXU).
    x = x_ref[...].astype(jnp.bfloat16)

    # Hidden block 1
    h = jnp.dot(x, w1_ref[...], preferred_element_type=jnp.float32)
    h = jnp.maximum(h + b1_ref[...], 0.0)

    # Hidden block 2 (BN of block 1 folded into w2/b2)
    h = jnp.dot(h.astype(jnp.bfloat16), w2_ref[...],
                preferred_element_type=jnp.float32)
    h = jnp.maximum(h + b2_ref[...], 0.0)

    # Hidden block 3 (BN of block 2 folded into w3/b3)
    h = jnp.dot(h.astype(jnp.bfloat16), w3_ref[...],
                preferred_element_type=jnp.float32)
    h = jnp.maximum(h + b3_ref[...], 0.0)

    # Output head (BN of block 3 folded into w4/b4):
    # (1, h3) x (tile_b, h3)^T -> (1, tile_b): lane-dense row output.
    out_row = jax.lax.dot_general(
        w4_ref[...], h.astype(jnp.bfloat16),
        dimension_numbers=(((1,), (1,)), ((), ())),
        preferred_element_type=jnp.float32)
    o_ref[0] = out_row + b4_ref[...]


def house_price_forward(x, kparams, *, tile_b=2048):
    """x: [B, input_dim] float32. kparams: folded kernel params. -> [B] f32."""
    B, input_dim = x.shape
    h1 = kparams["w1"].shape[1]
    h2 = kparams["w2"].shape[1]
    h3 = kparams["w3"].shape[1]

    # --- batch tile selection ------------------------------------------------
    # Multiple of 8 (sublanes).  Cap at ~half the 8-aligned batch so v7x's two
    # TensorCores both get grid steps; otherwise take the largest tile allowed.
    b8 = _round_up(B, 8)
    if b8 <= 8:
        tile = 8
    else:
        half = _round_up((b8 + 1) // 2, 8)
        tile = max(8, min(_round_up(tile_b, 8), half))
    num_tiles = pl.cdiv(B, tile)

    def const_spec(shape):
        # Full-shape block with a constant index_map: DMA'd once, VMEM-resident.
        return pl.BlockSpec(shape, lambda i, _n=len(shape): (0,) * _n)

    flops = 2 * B * (input_dim * h1 + h1 * h2 + h2 * h3 + h3 * 1)
    param_bytes = sum(int(v.size) * v.dtype.itemsize for v in kparams.values())
    bytes_accessed = (B * input_dim * x.dtype.itemsize   # x (f32, read once)
                      + param_bytes                       # resident weights
                      + num_tiles * tile * 4)             # f32 output

    out = pl.pallas_call(
        _mlp_kernel,
        out_shape=jax.ShapeDtypeStruct((num_tiles, 1, tile), jnp.float32),
        grid=(num_tiles,),
        in_specs=[
            pl.BlockSpec((tile, input_dim), lambda i: (i, 0)),   # x (pipelined)
            const_spec((input_dim, h1)), const_spec((1, h1)),
            const_spec((h1, h2)), const_spec((1, h2)),
            const_spec((h2, h3)), const_spec((1, h3)),
            const_spec((1, h3)), const_spec((1, 1)),
        ],
        out_specs=pl.BlockSpec((1, 1, tile), lambda i: (i, 0, 0)),
        compiler_params=pltpu.CompilerParams(
            dimension_semantics=("parallel",)),
        cost_estimate=pl.CostEstimate(flops=flops, transcendentals=0,
                                      bytes_accessed=bytes_accessed),
    )(x,
      kparams["w1"], kparams["b1"],
      kparams["w2"], kparams["b2"],
      kparams["w3"], kparams["b3"],
      kparams["w4"], kparams["b4"])

    # squeeze(-1) + drop rows from the (possibly partial) last tile.
    return out.reshape(num_tiles * tile)[:B]


def init_torch_params(key, input_dim, hidden_dims=HIDDEN_DIMS):
    """Random parameters matching the nn.Module's shapes (weights stored
    [in, out], i.e. transposed vs. PyTorch). BN affine/running stats are
    randomized (not identity) so the BN fold is actually exercised."""
    params = []
    dims = [input_dim] + list(hidden_dims)
    keys = jax.random.split(key, len(hidden_dims) + 1)
    for i, (din, dout) in enumerate(zip(dims[:-1], dims[1:])):
        kw, kb, kg, kbe, km, kv = jax.random.split(keys[i], 6)
        bound = 1.0 / math.sqrt(din)
        params.append({
            "w": jax.random.uniform(kw, (din, dout), jnp.float32, -bound, bound),
            "b": jax.random.uniform(kb, (dout,), jnp.float32, -bound, bound),
            "gamma": 1.0 + 0.1 * jax.random.normal(kg, (dout,), jnp.float32),
            "beta": 0.1 * jax.random.normal(kbe, (dout,), jnp.float32),
            "mean": 0.1 * jax.random.normal(km, (dout,), jnp.float32),
            "var": jnp.abs(1.0 + 0.1 * jax.random.normal(kv, (dout,), jnp.float32)),
        })
    din = dims[-1]
    kw, kb = jax.random.split(keys[-1])
    bound = 1.0 / math.sqrt(din)
    params.append({
        "w": jax.random.uniform(kw, (din, 1), jnp.float32, -bound, bound),
        "b": jax.random.uniform(kb, (1,), jnp.float32, -bound, bound),
    })
    return params


def fold_params(torch_params):
    """Fold eval-mode BN (post-ReLU affine y = h*s + t) into the next Linear:
    W' = diag(s) @ W, b' = t @ W + b. Exact because ReLU precedes BN."""
    hidden = torch_params[:-1]
    head = torch_params[-1]

    scales, shifts = [], []
    for layer in hidden:
        s = layer["gamma"] / jnp.sqrt(layer["var"] + BN_EPS)
        t = layer["beta"] - layer["mean"] * s
        scales.append(s)
        shifts.append(t)

    kp = {}
    # Layer 1: no preceding BN.
    kp["w1"] = hidden[0]["w"].astype(jnp.bfloat16)
    kp["b1"] = hidden[0]["b"].reshape(1, -1)
    # Layers 2, 3: fold BN of the previous hidden block.
    for i in (1, 2):
        w = scales[i - 1][:, None] * hidden[i]["w"]
        b = hidden[i]["b"] + shifts[i - 1] @ hidden[i]["w"]
        kp[f"w{i + 1}"] = w.astype(jnp.bfloat16)
        kp[f"b{i + 1}"] = b.reshape(1, -1)
    # Head: fold BN of block 3; stored as a bf16 (1, h3) row for the NT dot.
    w4 = scales[2][:, None] * head["w"]            # (h3, 1)
    b4 = head["b"] + shifts[2] @ head["w"]         # (1,)
    kp["w4"] = w4.reshape(1, -1).astype(jnp.bfloat16)
    kp["b4"] = b4.reshape(1, 1).astype(jnp.float32)
    return kp


def reference_forward(x, torch_params):
    """Pure-JAX f32 reference of the original (unfolded) eval-mode forward."""
    h = x
    for layer in torch_params[:-1]:
        h = h @ layer["w"] + layer["b"]
        h = jnp.maximum(h, 0.0)
        s = layer["gamma"] / jnp.sqrt(layer["var"] + BN_EPS)
        h = (h - layer["mean"]) * s + layer["beta"]
        # Dropout(p=0.2) is identity in eval mode.
    head = torch_params[-1]
    out = h @ head["w"] + head["b"]
    return out.reshape(x.shape[0])


if __name__ == "__main__":
    key = jax.random.PRNGKey(0)
    k_x, k_x2, k_p = jax.random.split(key, 3)

    input_dim = 32
    torch_params = init_torch_params(k_p, input_dim, hidden_dims=HIDDEN_DIMS)
    kparams = fold_params(torch_params)

    # Small aligned batch: single grid step.
    batch = 8
    x = jax.random.normal(k_x, (batch, input_dim), jnp.float32)
    y = house_price_forward(x, kparams)
    jax.block_until_ready(y)
    y_ref = reference_forward(x, torch_params)
    assert y.shape == (batch,)
    # bf16 matmul operands (f32 accumulation) => small drift vs. f32 reference.
    assert jnp.allclose(y, y_ref, atol=2e-2, rtol=2e-2), (y, y_ref)

    # Ragged batch: exercises >=2 grid steps and the padless partial last block.
    batch2 = 20
    x2 = jax.random.normal(k_x2, (batch2, input_dim), jnp.float32)
    y2 = house_price_forward(x2, kparams)
    jax.block_until_ready(y2)
    y2_ref = reference_forward(x2, torch_params)
    assert y2.shape == (batch2,)
    assert jnp.allclose(y2, y2_ref, atol=2e-2, rtol=2e-2), (y2, y2_ref)

    print("KERNEL_OK")
</pallas_src>

<mosaic_0001>
module attributes {stable_mosaic.version = 11 : i64} {
  func.func @_mlp_kernel(%arg0: i32, %arg1: memref<8x32xf32, #tpu.memory_space<vmem>>, %arg2: memref<32x256xbf16, #tpu.memory_space<vmem>>, %arg3: memref<1x256xf32, #tpu.memory_space<vmem>>, %arg4: memref<256x128xbf16, #tpu.memory_space<vmem>>, %arg5: memref<1x128xf32, #tpu.memory_space<vmem>>, %arg6: memref<128x64xbf16, #tpu.memory_space<vmem>>, %arg7: memref<1x64xf32, #tpu.memory_space<vmem>>, %arg8: memref<1x64xbf16, #tpu.memory_space<vmem>>, %arg9: memref<1x1xf32, #tpu.memory_space<vmem>>, %arg10: memref<1x1x8xf32, #tpu.memory_space<vmem>>) attributes {dimension_semantics = [#tpu.dimension_semantics<parallel>], iteration_bounds = array<i64: 1>, scalar_prefetch = 0 : i64, scratch_operands = 0 : i64, tpu.core_type = #tpu.core_type<tc>, window_params = [{transform_indices = @transform_0, window_bounds = array<i64: 8, 32>}, {pipeline_mode = #tpu.pipeline_mode<synchronous>, transform_indices = @transform_1, window_bounds = array<i64: 32, 256>}, {pipeline_mode = #tpu.pipeline_mode<synchronous>, transform_indices = @transform_2, window_bounds = array<i64: 1, 256>}, {pipeline_mode = #tpu.pipeline_mode<synchronous>, transform_indices = @transform_3, window_bounds = array<i64: 256, 128>}, {pipeline_mode = #tpu.pipeline_mode<synchronous>, transform_indices = @transform_4, window_bounds = array<i64: 1, 128>}, {pipeline_mode = #tpu.pipeline_mode<synchronous>, transform_indices = @transform_5, window_bounds = array<i64: 128, 64>}, {pipeline_mode = #tpu.pipeline_mode<synchronous>, transform_indices = @transform_6, window_bounds = array<i64: 1, 64>}, {pipeline_mode = #tpu.pipeline_mode<synchronous>, transform_indices = @transform_7, window_bounds = array<i64: 1, 64>}, {pipeline_mode = #tpu.pipeline_mode<synchronous>, transform_indices = @transform_8, window_bounds = array<i64: 1, 1>}, {transform_indices = @transform_9, window_bounds = array<i64: 1, 1, 8>}]} {
    %c0 = arith.constant 0 : index
    %c0_0 = arith.constant 0 : index
    %0 = vector.load %arg1[%c0, %c0_0] : memref<8x32xf32, #tpu.memory_space<vmem>>, vector<8x32xf32>
    %1 = arith.truncf %0 : vector<8x32xf32> to vector<8x32xbf16>
    %c0_1 = arith.constant 0 : index
    %c0_2 = arith.constant 0 : index
    %2 = vector.load %arg2[%c0_1, %c0_2] : memref<32x256xbf16, #tpu.memory_space<vmem>>, vector<32x256xbf16>
    %cst = arith.constant dense<0.000000e+00> : vector<8x256xf32>
    %3 = tpu.matmul %1, %2, %cst {dimension_numbers = #tpu.dot_dimension_numbers<[1], [0], [0], [1], [0, 0, 1, 1], [], []>} : vector<8x32xbf16>, vector<32x256xbf16>, vector<8x256xf32> -> vector<8x256xf32>
    %c0_3 = arith.constant 0 : index
    %c0_4 = arith.constant 0 : index
    %4 = vector.load %arg3[%c0_3, %c0_4] : memref<1x256xf32, #tpu.memory_space<vmem>>, vector<1x256xf32>
    %5 = vector.broadcast %4 : vector<1x256xf32> to vector<8x256xf32>
    %6 = arith.addf %3, %5 : vector<8x256xf32>
    %cst_5 = arith.constant 0.000000e+00 : f32
    %7 = vector.broadcast %cst_5 : f32 to vector<8x256xf32>
    %8 = arith.maximumf %6, %7 : vector<8x256xf32>
    %9 = arith.truncf %8 : vector<8x256xf32> to vector<8x256xbf16>
    %c0_6 = arith.constant 0 : index
    %c0_7 = arith.constant 0 : index
    %10 = vector.load %arg4[%c0_6, %c0_7] : memref<256x128xbf16, #tpu.memory_space<vmem>>, vector<256x128xbf16>
    %cst_8 = arith.constant dense<0.000000e+00> : vector<8x128xf32>
    %11 = tpu.matmul %9, %10, %cst_8 {dimension_numbers = #tpu.dot_dimension_numbers<[1], [0], [0], [1], [0, 0, 1, 1], [], []>} : vector<8x256xbf16>, vector<256x128xbf16>, vector<8x128xf32> -> vector<8x128xf32>
    %c0_9 = arith.constant 0 : index
    %c0_10 = arith.constant 0 : index
    %12 = vector.load %arg5[%c0_9, %c0_10] : memref<1x128xf32, #tpu.memory_space<vmem>>, vector<1x128xf32>
    %13 = vector.broadcast %12 : vector<1x128xf32> to vector<8x128xf32>
    %14 = arith.addf %11, %13 : vector<8x128xf32>
    %cst_11 = arith.constant 0.000000e+00 : f32
    %15 = vector.broadcast %cst_11 : f32 to vector<8x128xf32>
    %16 = arith.maximumf %14, %15 : vector<8x128xf32>
    %17 = arith.truncf %16 : vector<8x128xf32> to vector<8x128xbf16>
    %c0_12 = arith.constant 0 : index
    %c0_13 = arith.constant 0 : index
    %18 = vector.load %arg6[%c0_12, %c0_13] : memref<128x64xbf16, #tpu.memory_space<vmem>>, vector<128x64xbf16>
    %cst_14 = arith.constant dense<0.000000e+00> : vector<8x64xf32>
    %19 = tpu.matmul %17, %18, %cst_14 {dimension_numbers = #tpu.dot_dimension_numbers<[1], [0], [0], [1], [0, 0, 1, 1], [], []>} : vector<8x128xbf16>, vector<128x64xbf16>, vector<8x64xf32> -> vector<8x64xf32>
    %c0_15 = arith.constant 0 : index
    %c0_16 = arith.constant 0 : index
    %20 = vector.load %arg7[%c0_15, %c0_16] : memref<1x64xf32, #tpu.memory_space<vmem>>, vector<1x64xf32>
    %21 = vector.broadcast %20 : vector<1x64xf32> to vector<8x64xf32>
    %22 = arith.addf %19, %21 : vector<8x64xf32>
    %cst_17 = arith.constant 0.000000e+00 : f32
    %23 = vector.broadcast %cst_17 : f32 to vector<8x64xf32>
    %24 = arith.maximumf %22, %23 : vector<8x64xf32>
    %c0_18 = arith.constant 0 : index
    %c0_19 = arith.constant 0 : index
    %25 = vector.load %arg8[%c0_18, %c0_19] : memref<1x64xbf16, #tpu.memory_space<vmem>>, vector<1x64xbf16>
    %26 = arith.truncf %24 : vector<8x64xf32> to vector<8x64xbf16>
    %cst_20 = arith.constant dense<0.000000e+00> : vector<1x8xf32>
    %27 = tpu.matmul %25, %26, %cst_20 {dimension_numbers = #tpu.dot_dimension_numbers<[1], [1], [0], [0], [0, 0, 1, 0], [], []>} : vector<1x64xbf16>, vector<8x64xbf16>, vector<1x8xf32> -> vector<1x8xf32>
    %c0_21 = arith.constant 0 : index
    %c0_22 = arith.constant 0 : index
    %28 = vector.load %arg9[%c0_21, %c0_22] : memref<1x1xf32, #tpu.memory_space<vmem>>, vector<1x1xf32>
    %29 = vector.broadcast %28 : vector<1x1xf32> to vector<1x8xf32>
    %30 = arith.addf %27, %29 : vector<1x8xf32>
    %c0_23 = arith.constant 0 : index
    %c0_24 = arith.constant 0 : index
    %c0_25 = arith.constant 0 : index
    %31 = vector.load %arg10[%c0_23, %c0_24, %c0_25] : memref<1x1x8xf32, #tpu.memory_space<vmem>>, vector<1x1x8xf32>
    %32 = vector.shape_cast %31 : vector<1x1x8xf32> to vector<1x8xf32>
    %33 = vector.shape_cast %30 : vector<1x8xf32> to vector<1x1x8xf32>
    tpu.vector_store %arg10[%c0_23, %c0_24, %c0_25], %33 {strides = array<i32>} : memref<1x1x8xf32, #tpu.memory_space<vmem>>, vector<1x1x8xf32>,
    return
  }
  func.func @transform_0(%arg0: i32) -> (i32, i32) {
    %c0_i32 = arith.constant 0 : i32
    %c0_i32_0 = arith.constant 0 : i32
    return %arg0, %c0_i32 : i32, i32
  }
  func.func @transform_1(%arg0: i32) -> (i32, i32) {
    %c0_i32 = arith.constant 0 : i32
    %c0_i32_0 = arith.constant 0 : i32
    %c0_i32_1 = arith.constant 0 : i32
    return %c0_i32, %c0_i32_0 : i32, i32
  }
  func.func @transform_2(%arg0: i32) -> (i32, i32) {
    %c0_i32 = arith.constant 0 : i32
    %c0_i32_0 = arith.constant 0 : i32
    %c0_i32_1 = arith.constant 0 : i32
    return %c0_i32, %c0_i32_0 : i32, i32
  }
  func.func @transform_3(%arg0: i32) -> (i32, i32) {
    %c0_i32 = arith.constant 0 : i32
    %c0_i32_0 = arith.constant 0 : i32
    %c0_i32_1 = arith.constant 0 : i32
    return %c0_i32, %c0_i32_0 : i32, i32
  }
  func.func @transform_4(%arg0: i32) -> (i32, i32) {
    %c0_i32 = arith.constant 0 : i32
    %c0_i32_0 = arith.constant 0 : i32
    %c0_i32_1 = arith.constant 0 : i32
    return %c0_i32, %c0_i32_0 : i32, i32
  }
  func.func @transform_5(%arg0: i32) -> (i32, i32) {
    %c0_i32 = arith.constant 0 : i32
    %c0_i32_0 = arith.constant 0 : i32
    %c0_i32_1 = arith.constant 0 : i32
    return %c0_i32, %c0_i32_0 : i32, i32
  }
  func.func @transform_6(%arg0: i32) -> (i32, i32) {
    %c0_i32 = arith.constant 0 : i32
    %c0_i32_0 = arith.constant 0 : i32
    %c0_i32_1 = arith.constant 0 : i32
    return %c0_i32, %c0_i32_0 : i32, i32
  }
  func.func @transform_7(%arg0: i32) -> (i32, i32) {
    %c0_i32 = arith.constant 0 : i32
    %c0_i32_0 = arith.constant 0 : i32
    %c0_i32_1 = arith.constant 0 : i32
    return %c0_i32, %c0_i32_0 : i32, i32
  }
  func.func @transform_8(%arg0: i32) -> (i32, i32) {
    %c0_i32 = arith.constant 0 : i32
    %c0_i32_0 = arith.constant 0 : i32
    %c0_i32_1 = arith.constant 0 : i32
    return %c0_i32, %c0_i32_0 : i32, i32
  }
  func.func @transform_9(%arg0: i32) -> (i32, i32, i32) {
    %c0_i32 = arith.constant 0 : i32
    %c0_i32_0 = arith.constant 0 : i32
    %c0_i32_1 = arith.constant 0 : i32
    return %arg0, %c0_i32, %c0_i32_0 : i32, i32, i32
  }
}

</mosaic_0001>

<llo_original>
// kernel: tpu_custom_call.1
$region0: #{tpu_custom_call.1}
  #allocation0 [shape = 'u32[]', space=smem, size = 0x4, offset = 0x4, fixed_abs, tag = 'smem constant byte address 0x4 - core index']
  #allocation1 [shape = 'u32[72,128]{1,0:T(1,128)}', space=vmem, size = 0x9000, scoped, tag = 'internal scratch']
  #allocation2 [shape = 'f32[1,1]{1,0:T(1,128)S(1)}', space=vmem, size = 0x200, scoped, tag = 'scoped memory for tpu_custom_call.1']
  %s0 = inlined_call_operand.vmem [shape: f32[8,32], index: 0, kind: input, shape index: {}]
  %s1 = inlined_call_operand.vmem [shape: bf16[32,256], index: 1, kind: input, shape index: {}]
  %s2 = inlined_call_operand.vmem [shape: f32[1,256], index: 2, kind: input, shape index: {}]
  %s3 = inlined_call_operand.hbm [shape: bf16[256,128], index: 3, kind: input, shape index: {}]
  %s4 = inlined_call_operand.vmem [shape: f32[1,128], index: 4, kind: input, shape index: {}]
  %s5 = inlined_call_operand.vmem [shape: bf16[128,64], index: 5, kind: input, shape index: {}]
  %s6 = inlined_call_operand.vmem [shape: f32[1,64], index: 6, kind: input, shape index: {}]
  %s7 = inlined_call_operand.vmem [shape: bf16[1,64], index: 7, kind: input, shape index: {}]
  %s8 = inlined_call_operand.<no memory space> [shape: f32[1,1], index: 8, kind: input, shape index: {}]
  %s9 = inlined_call_operand.hbm [shape: f32[1,1,8], index: 9, kind: output, shape index: {}]
  %s10 = sld [smem:[#allocation0]]
  $region50: #{tpu_custom_call.1} parent=0
    _
  %s12 = ssub.s32 1, %s10
  %s13 = scalar_select 0, %s12, %s10
  %v14 = vstv %s8
  %15 = vst [vmem:[#allocation2] sm:$0x1] %v14
  $region1: #{tpu_custom_call.1} parent=0
    #allocation3 [shape = 'u8[65536]{0}', space=vmem, size = 0x10000, scoped, tag = 'input window, operand 3, single buffered']
    #allocation4 [shape = 's32[1]{0}', space=sflag, size = 0x4, scoped, tag = 'scoped memory for tpu_custom_call.1']
    #allocation5 [shape = 's32[1]{0}', space=sflag, size = 0x4, scoped, tag = 'scoped memory for tpu_custom_call.1']
    #allocation6 [shape = 'u8[512]{0}', space=vmem, size = 0x400, scoped, tag = 'output window, operand 0, single buffered']
    %16 = vsyncpa [#allocation4], 0
    %17 = vsyncpa [#allocation5], 0
    // Predicated region
    $region2: #{tpu_custom_call.1} parent=1 // pred_check
      _
    $region3: #{tpu_custom_call.1} parent=1 // pred_check_branch
      %19 = sbr.rel (0) target = $region5
    $region4: #{tpu_custom_call.1} parent=1 // pred_region
      _
    $region5: #{tpu_custom_call.1} parent=1 // pred_fallthru
      _
    // Predicated region
    $region6: #{tpu_custom_call.1} parent=1 // pred_check
      _
    $region7: #{tpu_custom_call.1} parent=1 // pred_check_branch
      %21 = sbr.rel (0) target = $region9
    $region8: #{tpu_custom_call.1} parent=1 // pred_region
      _
    $region9: #{tpu_custom_call.1} parent=1 // pred_fallthru
      _
    // Predicated region
    $region10: #{tpu_custom_call.1} parent=1 // pred_check
      _
    $region11: #{tpu_custom_call.1} parent=1 // pred_check_branch
      %23 = sbr.rel (0) target = $region13
    $region12: #{tpu_custom_call.1} parent=1 // pred_region
      _
    $region13: #{tpu_custom_call.1} parent=1 // pred_fallthru
      _
    // Predicated region
    $region14: #{tpu_custom_call.1} parent=1 // pred_check
      _
    $region15: #{tpu_custom_call.1} parent=1 // pred_check_branch
      %25 = sbr.rel (0) target = $region17
    $region16: #{tpu_custom_call.1} parent=1 // pred_region
      %27 = vsyncadd [#allocation4], 0
      %s28 = sshll.u32 %s3, 4
      %s29 = int_to_ptr.hbm [resolvable:$true] %s28
      %s30 = sshll.u32 [#allocation3], 4
      %s31 = int_to_ptr.vmem [resolvable:$true] %s30
      %36 = dma.hbm_to_vmem [thread:$0]  %s29, 2048, %s31, [#allocation4], 64, 64, 4
    $region17: #{tpu_custom_call.1} parent=1 // pred_fallthru
      _
    // Predicated region
    $region18: #{tpu_custom_call.1} parent=1 // pred_check
      _
    $region19: #{tpu_custom_call.1} parent=1 // pred_check_branch
      %38 = sbr.rel (0) target = $region21
    $region20: #{tpu_custom_call.1} parent=1 // pred_region
      _
    $region21: #{tpu_custom_call.1} parent=1 // pred_fallthru
      _
    // Predicated region
    $region22: #{tpu_custom_call.1} parent=1 // pred_check
      _
    $region23: #{tpu_custom_call.1} parent=1 // pred_check_branch
      %40 = sbr.rel (0) target = $region25
    $region24: #{tpu_custom_call.1} parent=1 // pred_region
      _
    $region25: #{tpu_custom_call.1} parent=1 // pred_fallthru
      _
    // Predicated region
    $region26: #{tpu_custom_call.1} parent=1 // pred_check
      _
    $region27: #{tpu_custom_call.1} parent=1 // pred_check_branch
      %42 = sbr.rel (0) target = $region29
    $region28: #{tpu_custom_call.1} parent=1 // pred_region
      _
    $region29: #{tpu_custom_call.1} parent=1 // pred_fallthru
      _
    // Predicated region
    $region30: #{tpu_custom_call.1} parent=1 // pred_check
      _
    $region31: #{tpu_custom_call.1} parent=1 // pred_check_branch
      %44 = sbr.rel (0) target = $region33
    $region32: #{tpu_custom_call.1} parent=1 // pred_region
      _
    $region33: #{tpu_custom_call.1} parent=1 // pred_fallthru
      _
    // Predicated region
    $region34: #{tpu_custom_call.1} parent=1 // pred_check
      _
    $region35: #{tpu_custom_call.1} parent=1 // pred_check_branch
      %46 = sbr.rel (0) target = $region37
    $region36: #{tpu_custom_call.1} parent=1 // pred_region
      _
    $region37: #{tpu_custom_call.1} parent=1 // pred_fallthru
      _
    // Predicated region
    $region38: #{tpu_custom_call.1} parent=1 // pred_check
      _
    $region39: #{tpu_custom_call.1} parent=1 // pred_check_branch
      %48 = sbr.rel (0) target = $region41
    $region40: #{tpu_custom_call.1} parent=1 // pred_region
      %50 = dma.done [#allocation4], 2048
    $region41: #{tpu_custom_call.1} parent=1 // pred_fallthru
      _
    %v52 = vld [vmem:[%s0] sm:$0xff]
    %v53 = vpack.c.bf16 %v52, %v52
    %v54 = vld [vmem:[%s1] sm:$0xff]
    %v55 = vld [vmem:[%s1 + $0x8] sm:$0xff]
    %v56 = vld [vmem:[%s1 + $0x10] sm:$0xff]
    %v57 = vld [vmem:[%s1 + $0x18] sm:$0xff]
    %v58 = vld [vmem:[%s2] sm:$0x3]
    %v60 = vperm.slane %v58, 0
    %v61 = vperm.slane %v58, 1
    %v68 = vunpack.c.l.b16 %v54
    %v69 = vunpack.c.h.b16 %v54
    %v70 = vunpack.c.l.b16 %v55
    %v71 = vunpack.c.h.b16 %v55
    %v72 = vunpack.c.l.b16 %v56
    %v73 = vunpack.c.h.b16 %v56
    %v74 = vunpack.c.l.b16 %v57
    %v75 = vunpack.c.h.b16 %v57
    %v76 = vpack.c.b16 %v70, %v68
    %v77 = vpack.c.b16 %v71, %v69
    %v78 = vpack.c.b16 %v74, %v72
    %v79 = vpack.c.b16 %v75, %v73
    %vm84 = vcmask 261120
    %v86 = vsel %vm84, %v53, 0
    %88 = vmatpush.bf16.msra.mxu0 0
    %89 = vmatpush.bf16.msra.mxu0 0
    %90 = vmatpush.bf16.msra.mxu0 0
    %91 = vmatpush.bf16.msra.mxu0 0
    %92 = vmatpush.bf16.msra.mxu0 0
    %93 = vmatpush.bf16.msra.mxu0 0
    %94 = vmatpush.bf16.msra.mxu0 %v78
    %95 = vmatpush.bf16.msra.mxu0 %v76
    %96 = vmatmul.bf16.gmra.mxu0 %v86
    %v97 = vpop.f32.mrf.mxu0
    %v98 = vadd.f32 %v60, %v97
    %v99 = vpop.f32.mrf.mxu0
    %100 = vdwg.mxu0
    %101 = vmatpush.bf16.msra.mxu0 0
    %102 = vmatpush.bf16.msra.mxu0 0
    %103 = vmatpush.bf16.msra.mxu0 0
    %104 = vmatpush.bf16.msra.mxu0 0
    %105 = vmatpush.bf16.msra.mxu0 0
    %106 = vmatpush.bf16.msra.mxu0 0
    %107 = vmatpush.bf16.msra.mxu0 %v79
    %108 = vmatpush.bf16.msra.mxu0 %v77
    %109 = vmatmul.bf16.gmra.mxu0 %v86
    %v110 = vpop.f32.mrf.mxu0
    %v111 = vadd.f32 %v61, %v110
    %v112 = vpop.f32.mrf.mxu0
    %113 = vdwg.mxu0
    %v114 = vmax.f32 %v98, 0.0
    %v115 = vmax.f32 %v111, 0.0
    %v116 = vpack.c.bf16 %v114, %v114
    %v117 = vpack.c.bf16 %v115, %v115
    %v118 = vld [vmem:[#allocation3] sm:$0xf]
    %v119 = vld [vmem:[#allocation3 + $0x4] sm:$0xf]
    %v120 = vld [vmem:[#allocation3 + $0x8] sm:$0xf]
    %v121 = vld [vmem:[#allocation3 + $0xc] sm:$0xf]
    %v122 = vld [vmem:[#allocation3 + $0x10] sm:$0xf]
    %v123 = vld [vmem:[#allocation3 + $0x14] sm:$0xf]
    %v124 = vld [vmem:[#allocation3 + $0x18] sm:$0xf]
    %v125 = vld [vmem:[#allocation3 + $0x1c] sm:$0xf]
    %v126 = vld [vmem:[#allocation3 + $0x20] sm:$0xf]
    %v127 = vld [vmem:[#allocation3 + $0x24] sm:$0xf]
    %v128 = vld [vmem:[#allocation3 + $0x28] sm:$0xf]
    %v129 = vld [vmem:[#allocation3 + $0x2c] sm:$0xf]
    %v130 = vld [vmem:[#allocation3 + $0x30] sm:$0xf]
    %v131 = vld [vmem:[#allocation3 + $0x34] sm:$0xf]
    %v132 = vld [vmem:[#allocation3 + $0x38] sm:$0xf]
    %v133 = vld [vmem:[#allocation3 + $0x3c] sm:$0xf]
    %v134 = vld [vmem:[#allocation3 + $0x40] sm:$0xf]
    %v135 = vld [vmem:[#allocation3 + $0x44] sm:$0xf]
    %v136 = vld [vmem:[#allocation3 + $0x48] sm:$0xf]
    %v137 = vld [vmem:[#allocation3 + $0x4c] sm:$0xf]
    %v138 = vld [vmem:[#allocation3 + $0x50] sm:$0xf]
    %v139 = vld [vmem:[#allocation3 + $0x54] sm:$0xf]
    %v140 = vld [vmem:[#allocation3 + $0x58] sm:$0xf]
    %v141 = vld [vmem:[#allocation3 + $0x5c] sm:$0xf]
    %v142 = vld [vmem:[#allocation3 + $0x60] sm:$0xf]
    %v143 = vld [vmem:[#allocation3 + $0x64] sm:$0xf]
    %v144 = vld [vmem:[#allocation3 + $0x68] sm:$0xf]
    %v145 = vld [vmem:[#allocation3 + $0x6c] sm:$0xf]
    %v146 = vld [vmem:[#allocation3 + $0x70] sm:$0xf]
    %v147 = vld [vmem:[#allocation3 + $0x74] sm:$0xf]
    %v148 = vld [vmem:[#allocation3 + $0x78] sm:$0xf]
    %v149 = vld [vmem:[#allocation3 + $0x7c] sm:$0xf]
    %v150 = vld [vmem:[%s4] sm:$0x1]
    %v152 = vperm.slane %v150, 0
    %v186 = vunpack.c.l.b16 %v118
    %v187 = vunpack.c.l.b16 %v119
    %v188 = vunpack.c.l.b16 %v120
    %v189 = vunpack.c.l.b16 %v121
    %v190 = vunpack.c.l.b16 %v122
    %v191 = vunpack.c.l.b16 %v123
    %v192 = vunpack.c.l.b16 %v124
    %v193 = vunpack.c.l.b16 %v125
    %v194 = vunpack.c.l.b16 %v126
    %v195 = vunpack.c.l.b16 %v127
    %v196 = vunpack.c.l.b16 %v128
    %v197 = vunpack.c.l.b16 %v129
    %v198 = vunpack.c.l.b16 %v130
    %v199 = vunpack.c.l.b16 %v131
    %v200 = vunpack.c.l.b16 %v132
    %v201 = vunpack.c.l.b16 %v133
    %v202 = vunpack.c.l.b16 %v134
    %v203 = vunpack.c.l.b16 %v135
    %v204 = vunpack.c.l.b16 %v136
    %v205 = vunpack.c.l.b16 %v137
    %v206 = vunpack.c.l.b16 %v138
    %v207 = vunpack.c.l.b16 %v139
    %v208 = vunpack.c.l.b16 %v140
    %v209 = vunpack.c.l.b16 %v141
    %v210 = vunpack.c.l.b16 %v142
    %v211 = vunpack.c.l.b16 %v143
    %v212 = vunpack.c.l.b16 %v144
    %v213 = vunpack.c.l.b16 %v145
    %v214 = vunpack.c.l.b16 %v146
    %v215 = vunpack.c.l.b16 %v147
    %v216 = vunpack.c.l.b16 %v148
    %v217 = vunpack.c.l.b16 %v149
    %v218 = vpack.c.b16 %v187, %v186
    %v219 = vpack.c.b16 %v189, %v188
    %v220 = vpack.c.b16 %v191, %v190
    %v221 = vpack.c.b16 %v193, %v192
    %v222 = vpack.c.b16 %v195, %v194
    %v223 = vpack.c.b16 %v197, %v196
    %v224 = vpack.c.b16 %v199, %v198
    %v225 = vpack.c.b16 %v201, %v200
    %v226 = vpack.c.b16 %v203, %v202
    %v227 = vpack.c.b16 %v205, %v204
    %v228 = vpack.c.b16 %v207, %v206
    %v229 = vpack.c.b16 %v209, %v208
    %v230 = vpack.c.b16 %v211, %v210
    %v231 = vpack.c.b16 %v213, %v212
    %v232 = vpack.c.b16 %v215, %v214
    %v233 = vpack.c.b16 %v217, %v216
    %250 = vmatpush.bf16.msra.mxu0 %v225
    %251 = vmatpush.bf16.msra.mxu0 %v224
    %252 = vmatpush.bf16.msra.mxu0 %v223
    %253 = vmatpush.bf16.msra.mxu0 %v222
    %254 = vmatpush.bf16.msra.mxu0 %v221
    %255 = vmatpush.bf16.msra.mxu0 %v220
    %256 = vmatpush.bf16.msra.mxu0 %v219
    %257 = vmatpush.bf16.msra.mxu0 %v218
    %258 = vmatmul.bf16.gmra.mxu0 %v116
    %v259 = vpop.f32.mrf.mxu0
    %v260 = vadd.f32 %v152, %v259
    %v261 = vpop.f32.mrf.mxu0
    %262 = vdwg.mxu0
    %263 = vmatpush.bf16.msra.mxu0 %v233
    %264 = vmatpush.bf16.msra.mxu0 %v232
    %265 = vmatpush.bf16.msra.mxu0 %v231
    %266 = vmatpush.bf16.msra.mxu0 %v230
    %267 = vmatpush.bf16.msra.mxu0 %v229
    %268 = vmatpush.bf16.msra.mxu0 %v228
    %269 = vmatpush.bf16.msra.mxu0 %v227
    %270 = vmatpush.bf16.msra.mxu0 %v226
    %271 = vmatmul.bf16.gmra.mxu0 %v117
    %v272 = vpop.f32.mrf.mxu0
    %v273 = vadd.f32 %v260, %v272
    %v274 = vpop.f32.mrf.mxu0
    %275 = vdwg.mxu0
    %v276 = vmax.f32 %v273, 0.0
    %v277 = vpack.c.bf16 %v276, %v276
    %v278 = vld [vmem:[%s5] sm:$0xf]
    %v279 = vld [vmem:[%s5 + $0x4] sm:$0xf]
    %v280 = vld [vmem:[%s5 + $0x8] sm:$0xf]
    %v281 = vld [vmem:[%s5 + $0xc] sm:$0xf]
    %v282 = vld [vmem:[%s5 + $0x10] sm:$0xf]
    %v283 = vld [vmem:[%s5 + $0x14] sm:$0xf]
    %v284 = vld [vmem:[%s5 + $0x18] sm:$0xf]
    %v285 = vld [vmem:[%s5 + $0x1c] sm:$0xf]
    %v286 = vld [vmem:[%s5 + $0x20] sm:$0xf]
    %v287 = vld [vmem:[%s5 + $0x24] sm:$0xf]
    %v288 = vld [vmem:[%s5 + $0x28] sm:$0xf]
    %v289 = vld [vmem:[%s5 + $0x2c] sm:$0xf]
    %v290 = vld [vmem:[%s5 + $0x30] sm:$0xf]
    %v291 = vld [vmem:[%s5 + $0x34] sm:$0xf]
    %v292 = vld [vmem:[%s5 + $0x38] sm:$0xf]
    %v293 = vld [vmem:[%s5 + $0x3c] sm:$0xf]
    %v294 = vld [vmem:[%s6] sm:$0x1]
    %v296 = vperm.slane %v294, 0
    %v314 = vunpack.c.l.b16 %v278
    %v315 = vunpack.c.l.b16 %v279
    %v316 = vunpack.c.l.b16 %v280
    %v317 = vunpack.c.l.b16 %v281
    %v318 = vunpack.c.l.b16 %v282
    %v319 = vunpack.c.l.b16 %v283
    %v320 = vunpack.c.l.b16 %v284
    %v321 = vunpack.c.l.b16 %v285
    %v322 = vunpack.c.l.b16 %v286
    %v323 = vunpack.c.l.b16 %v287
    %v324 = vunpack.c.l.b16 %v288
    %v325 = vunpack.c.l.b16 %v289
    %v326 = vunpack.c.l.b16 %v290
    %v327 = vunpack.c.l.b16 %v291
    %v328 = vunpack.c.l.b16 %v292
    %v329 = vunpack.c.l.b16 %v293
    %v330 = vpack.c.b16 %v315, %v314
    %v331 = vpack.c.b16 %v317, %v316
    %v332 = vpack.c.b16 %v319, %v318
    %v333 = vpack.c.b16 %v321, %v320
    %v334 = vpack.c.b16 %v323, %v322
    %v335 = vpack.c.b16 %v325, %v324
    %v336 = vpack.c.b16 %v327, %v326
    %v337 = vpack.c.b16 %v329, %v328
    %346 = vmatpush.bf16.msra.mxu0 %v337
    %347 = vmatpush.bf16.msra.mxu0 %v336
    %348 = vmatpush.bf16.msra.mxu0 %v335
    %349 = vmatpush.bf16.msra.mxu0 %v334
    %350 = vmatpush.bf16.msra.mxu0 %v333
    %351 = vmatpush.bf16.msra.mxu0 %v332
    %352 = vmatpush.bf16.msra.mxu0 %v331
    %353 = vmatpush.bf16.msra.mxu0 %v330
    %354 = vmatmul.bf16.gmra.mxu0 %v277
    %v355 = vpop.f32.mrf.mxu0
    %v356 = vadd.f32 %v296, %v355
    %v357 = vpop.f32.mrf.mxu0
    %358 = vdwg.mxu0
    %v359 = vmax.f32 %v356, 0.0
    %v360 = vld [vmem:[%s7] sm:$0x1]
    %v361 = vpack.c.bf16 %v359, %v359
    %v362 = vld [vmem:[#allocation2] sm:$0x1]
    %364 = vset.pattern.permute.xlu0 0
    %365 = vperm.xlu0 %364, %v362
    %v366 = vpop.permute.xlu0 %365
    %v368 = vperm.slane %v366, 0
    %vm369 = vcmask 523264
    %v371 = vsel %vm369, %v360, 0
    %v374 = vsel %vm369, %v361, 0
    %376 = vmatpush.bf16.xpose.msra.mxu0 0
    %377 = vmatpush.bf16.xpose.msra.mxu0 0
    %378 = vmatpush.bf16.xpose.msra.mxu0 0
    %379 = vmatpush.bf16.xpose.msra.mxu0 0
    %380 = vmatpush.bf16.xpose.msra.mxu0 0
    %381 = vmatpush.bf16.xpose.msra.mxu0 0
    %382 = vmatpush.bf16.xpose.msra.mxu0 0
    %383 = vmatpush.bf16.xpose.msra.mxu0 %v374
    %384 = vmatmul.bf16.gmra.mxu0 %v371
    %v385 = vpop.f32.mrf.mxu0
    %v386 = vadd.f32 %v368, %v385
    %v387 = vpop.f32.mrf.mxu0
    %388 = vdwg.mxu0
    %vm389 = vcmask 57344
    %390 = vst.msk [vmem:[#allocation6] sm:$0x1] %vm389, %v386
    // Predicated region
    $region42: #{tpu_custom_call.1} parent=1 // pred_check
      _
    $region43: #{tpu_custom_call.1} parent=1 // pred_check_branch
      %392 = sbr.rel (0) target = $region45
    $region44: #{tpu_custom_call.1} parent=1 // pred_region
      %394 = vsyncadd [#allocation5], 0
      %s396 = sshll.u32 [#allocation6], 4
      %s397 = int_to_ptr.vmem [resolvable:$true] %s396
      %s398 = sshll.u32 %s9, 4
      %s399 = int_to_ptr.hbm [resolvable:$true] %s398
      %401 = dma.vmem_to_hbm [thread:$0]  %s397, 16, %s399, [#allocation5]
    $region45: #{tpu_custom_call.1} parent=1 // pred_fallthru
      _
    // Predicated region
    $region46: #{tpu_custom_call.1} parent=1 // pred_check
      _
    $region47: #{tpu_custom_call.1} parent=1 // pred_check_branch
      %403 = sbr.rel (0) target = $region49
    $region48: #{tpu_custom_call.1} parent=1 // pred_region
      %405 = dma.done [#allocation5], 16
    $region49: #{tpu_custom_call.1} parent=1 // pred_fallthru
      _
    %406 = vsyncpa [#allocation4], 1
    %407 = vsyncpa [#allocation5], 1

</llo_original>
